<compile_context>
chip_gen: v6e
topology: v6e:2x2x1
jax: 0.10.0
libtpu: 0.0.40
codegen_flags: <defaults>
</compile_context>

<pallas_src>
import jax
import jax.numpy as jnp
from jax.experimental import pallas as pl
from jax.experimental.pallas import tpu as pltpu


def _softmax_rows_kernel(x_ref, o_ref):
    # x_ref / o_ref: (TILE_ROWS, L_pad) block in VMEM.
    x = x_ref[...].astype(jnp.float32)
    ex = jnp.exp(x)                                   # EUP
    denom = jnp.sum(ex, axis=-1, keepdims=True)       # XLU row reduce
    o_ref[...] = (ex / denom).astype(o_ref.dtype)     # exact divide (VPU)


def softmax_legit_2d(x, *, target_block_bytes=2 * 1024 * 1024):
    """x: (N, C, H, W) -> exp(x) / sum(exp(x), axis=(2, 3), keepdims=True)."""
    N, C, H, W = x.shape
    R = N * C
    L = H * W
    x2 = x.reshape(R, L)

    # Lane-dense last dim: pad H*W up to a multiple of 128.
    L_pad = max(128, ((L + 127) // 128) * 128)
    lane_pad = L_pad - L

    # Row tile: big enough to amortize per-step overhead, small enough that
    # double-buffered in+out blocks fit the default scoped VMEM everywhere
    # (v5e 16 MiB, v6e/v7x 32 MiB): ~2 MiB per block -> <= ~8 MiB live.
    bytes_per_row = L_pad * max(4, x.dtype.itemsize)  # f32 accumulation bound
    tile_rows = target_block_bytes // bytes_per_row
    tile_rows = int(max(8, min(2048, tile_rows)))
    tile_rows = max(8, (tile_rows // 8) * 8)
    tile_rows = min(tile_rows, ((R + 7) // 8) * 8)    # don't exceed the data

    R_pad = ((R + tile_rows - 1) // tile_rows) * tile_rows
    row_pad = R_pad - R

    if lane_pad:
        # exp(-1e30) == 0 in f32, so padded lanes add nothing to row sums.
        x2 = jnp.pad(x2, ((0, 0), (0, lane_pad)), constant_values=-1e30)
    if row_pad:
        # Padded rows compute a harmless softmax of zeros and are discarded.
        x2 = jnp.pad(x2, ((0, row_pad), (0, 0)))

    out = pl.pallas_call(
        _softmax_rows_kernel,
        out_shape=jax.ShapeDtypeStruct((R_pad, L_pad), x.dtype),
        grid=(R_pad // tile_rows,),
        in_specs=[pl.BlockSpec((tile_rows, L_pad), lambda i: (i, 0))],
        out_specs=pl.BlockSpec((tile_rows, L_pad), lambda i: (i, 0)),
        compiler_params=pltpu.CompilerParams(
            dimension_semantics=("parallel",),
        ),
    )(x2)

    return out[:R, :L].reshape(N, C, H, W)


if __name__ == "__main__":
    key = jax.random.PRNGKey(0)
    x = jax.random.normal(key, (2, 4, 16, 16), dtype=jnp.float32)

    out = softmax_legit_2d(x)
    out = jax.block_until_ready(out)

    # Reference in plain JAX for sanity.
    ex = jnp.exp(x)
    ref = ex / jnp.sum(ex, axis=(2, 3), keepdims=True)
    assert out.shape == x.shape
    assert jnp.allclose(out, ref, atol=1e-6, rtol=1e-6)

    print("KERNEL_OK")
</pallas_src>

<mosaic_0001>
module attributes {stable_mosaic.version = 11 : i64} {
  func.func @_softmax_rows_kernel(%arg0: i32, %arg1: memref<8x256xf32, #tpu.memory_space<vmem>>, %arg2: memref<8x256xf32, #tpu.memory_space<vmem>>) attributes {dimension_semantics = [#tpu.dimension_semantics<parallel>], iteration_bounds = array<i64: 1>, scalar_prefetch = 0 : i64, scratch_operands = 0 : i64, tpu.core_type = #tpu.core_type<tc>, window_params = [{transform_indices = @transform_0, window_bounds = array<i64: 8, 256>}, {transform_indices = @transform_1, window_bounds = array<i64: 8, 256>}]} {
    %c0 = arith.constant 0 : index
    %c0_0 = arith.constant 0 : index
    %0 = vector.load %arg1[%c0, %c0_0] : memref<8x256xf32, #tpu.memory_space<vmem>>, vector<8x256xf32>
    %1 = math.exp %0 : vector<8x256xf32>
    %cst = arith.constant dense<0.000000e+00> : vector<8xf32>
    %2 = vector.multi_reduction <add>, %1, %cst [1] : vector<8x256xf32> to vector<8xf32>
    %3 = vector.shape_cast %2 : vector<8xf32> to vector<8x1xf32>
    %4 = vector.broadcast %3 : vector<8x1xf32> to vector<8x256xf32>
    %5 = arith.divf %1, %4 : vector<8x256xf32>
    %c0_1 = arith.constant 0 : index
    %c0_2 = arith.constant 0 : index
    %6 = vector.load %arg2[%c0_1, %c0_2] : memref<8x256xf32, #tpu.memory_space<vmem>>, vector<8x256xf32>
    tpu.vector_store %arg2[%c0_1, %c0_2], %5 {strides = array<i32>} : memref<8x256xf32, #tpu.memory_space<vmem>>, vector<8x256xf32>,
    return
  }
  func.func @transform_0(%arg0: i32) -> (i32, i32) {
    %c0_i32 = arith.constant 0 : i32
    %c0_i32_0 = arith.constant 0 : i32
    return %arg0, %c0_i32 : i32, i32
  }
  func.func @transform_1(%arg0: i32) -> (i32, i32) {
    %c0_i32 = arith.constant 0 : i32
    %c0_i32_0 = arith.constant 0 : i32
    return %arg0, %c0_i32 : i32, i32
  }
}

</mosaic_0001>

<llo_original>
// kernel: tpu_custom_call.1
$region0: #{tpu_custom_call.1}
  #allocation0 [shape = 'u32[]', space=smem, size = 0x4, offset = 0x4, fixed_abs, tag = 'smem constant byte address 0x4 - core index']
  #allocation1 [shape = 'u32[144,128]{1,0:T(1,128)}', space=vmem, size = 0x12000, scoped, tag = 'internal scratch']
  %s0 = inlined_call_operand.hbm [shape: f32[8,256], index: 0, kind: input, shape index: {}]
  %s1 = inlined_call_operand.hbm [shape: f32[8,256], index: 1, kind: output, shape index: {}]
  %s2 = sld [smem:[#allocation0]]
  $region18: #{tpu_custom_call.1} parent=0
    _
  %s4 = ssub.s32 1, %s2
  %s5 = scalar_select 0, %s4, %s2
  $region1: #{tpu_custom_call.1} parent=0
    #allocation2 [shape = 'u8[8192]{0}', space=vmem, size = 0x2000, scoped, tag = 'input window, operand 0, single buffered']
    #allocation3 [shape = 's32[1]{0}', space=sflag, size = 0x4, scoped, tag = 'scoped memory for tpu_custom_call.1']
    #allocation4 [shape = 's32[1]{0}', space=sflag, size = 0x4, scoped, tag = 'scoped memory for tpu_custom_call.1']
    #allocation5 [shape = 'u8[8192]{0}', space=vmem, size = 0x2000, scoped, tag = 'output window, operand 0, single buffered']
    %6 = vsyncpa [#allocation3], 0
    %7 = vsyncpa [#allocation4], 0
    // Predicated region
    $region2: #{tpu_custom_call.1} parent=1 // pred_check
      _
    $region3: #{tpu_custom_call.1} parent=1 // pred_check_branch
      %9 = sbr.rel (0) target = $region5
    $region4: #{tpu_custom_call.1} parent=1 // pred_region
      %s11 = ssub.s32 256, 256
      %12 = vsyncadd [#allocation3], %s11
      %s14 = sshll.u32 [#allocation2], 4
      %s15 = int_to_ptr.vmem [resolvable:$true] %s14
      %17 = dma.hbm_to_vmem [thread:$0]  %s0, 256, %s15, [#allocation3]
    $region5: #{tpu_custom_call.1} parent=1 // pred_fallthru
      _
    // Predicated region
    $region6: #{tpu_custom_call.1} parent=1 // pred_check
      _
    $region7: #{tpu_custom_call.1} parent=1 // pred_check_branch
      %19 = sbr.rel (0) target = $region9
    $region8: #{tpu_custom_call.1} parent=1 // pred_region
      %20 = dma.done [#allocation3], 256
    $region9: #{tpu_custom_call.1} parent=1 // pred_fallthru
      _
    %v21 = vld [vmem:[#allocation2] sm:$0xff]
    %v22 = vld [vmem:[#allocation2 + $0x8] sm:$0xff]
    %v23 = vmul.f32 %v21, 1.442695
    %v24 = vpow.pop %v23
    %v25 = vmul.f32 %v22, 1.442695
    %v26 = vpow.pop %v25
    %v27 = vadd.f32 %v24, %v26
    %28 = vadd.xlane.f32.xlu0 %v27
    %v29 = vpop.xlane.xlu0 %28
    %v30 = vrcp.pop %v29
    %v31 = vmul.f32 %v24, %v30
    %v32 = vmul.f32 %v26, %v30
    %33 = vst [vmem:[#allocation5] sm:$0xff] %v31
    %34 = vst [vmem:[#allocation5 + $0x8] sm:$0xff] %v32
    // Predicated region
    $region10: #{tpu_custom_call.1} parent=1 // pred_check
      _
    $region11: #{tpu_custom_call.1} parent=1 // pred_check_branch
      %36 = sbr.rel (0) target = $region13
    $region12: #{tpu_custom_call.1} parent=1 // pred_region
      %s38 = ssub.s32 256, 256
      %39 = vsyncadd [#allocation4], %s38
      %s41 = sshll.u32 [#allocation5], 4
      %s42 = int_to_ptr.vmem [resolvable:$true] %s41
      %44 = dma.vmem_to_hbm [thread:$0]  %s42, 256, %s1, [#allocation4]
    $region13: #{tpu_custom_call.1} parent=1 // pred_fallthru
      _
    // Predicated region
    $region14: #{tpu_custom_call.1} parent=1 // pred_check
      _
    $region15: #{tpu_custom_call.1} parent=1 // pred_check_branch
      %46 = sbr.rel (0) target = $region17
    $region16: #{tpu_custom_call.1} parent=1 // pred_region
      %47 = dma.done [#allocation4], 256
    $region17: #{tpu_custom_call.1} parent=1 // pred_fallthru
      _
    %48 = vsyncpa [#allocation3], 1
    %49 = vsyncpa [#allocation4], 1

</llo_original>
